<compile_context>
chip_gen: v7x
topology: tpu7x:2x2x1
jax: 0.10.0
libtpu: 0.0.40
codegen_flags: <defaults>
</compile_context>

<pallas_src>
import math

import jax
import jax.numpy as jnp
from jax.experimental import pallas as pl
from jax.experimental.pallas import tpu as pltpu


def _round_up(x, m):
    return ((x + m - 1) // m) * m


def _mlp_kernel(x_ref, w_ref, b_ref, o_ref):
    # Per-tile cast of the streamed f32 x to bf16 (single-pass MXU path);
    # W is already bf16 and VMEM-resident across all grid steps.
    x = x_ref[...].astype(jnp.bfloat16)
    acc = jnp.dot(x, w_ref[...], preferred_element_type=jnp.float32)
    o_ref[...] = (acc + b_ref[...]).astype(o_ref.dtype)


def _vmem_budgets():
    """(tiling_budget_bytes, vmem_limit_bytes) derived per TPU generation."""
    try:
        cap = pltpu.get_tpu_info().vmem_capacity_bytes
    except Exception:
        cap = 64 * 1024 * 1024  # conservative fallback (v7x per-TC capacity)
    # ~5/8 of physical for live tiles, ~3/4 as the scoped-VMEM limit:
    #   v7x (64 MiB)  -> 40 / 48 MiB
    #   v5e/v6e (128) -> 80 / 96 MiB
    return (cap * 5) // 8, (cap * 3) // 4


def mlp_classifier_forward(x, weight, bias, *, tm_cap=1024):
    """out = x @ weight + bias   (dropout is a no-op in eval mode)."""
    n, nfeat = x.shape
    nfeat_w, nclass = weight.shape
    assert nfeat == nfeat_w and bias.shape == (nclass,)

    # Lane-dense output: pad nclass up to a multiple of 128 (tiny W/bias copy,
    # sliced off after the call).  K (nfeat) is taken at full extent, so it
    # needs no 128-alignment and no x padding.
    n_pad = _round_up(nclass, 128)

    tiling_budget, vmem_limit = _vmem_budgets()

    # VMEM accounting: resident W (bf16) + bias, double-buffered f32 x tile and
    # double-buffered f32 out tile per M row.
    resident = nfeat * n_pad * 2 + n_pad * 4
    per_row = 2 * nfeat * 4 + 2 * n_pad * 4
    avail = max(tiling_budget - resident, per_row * 8)

    if n <= 8:
        tm_eff = n  # full-extent M block (allowed even if not a multiple of 8)
    else:
        tm_eff = min(tm_cap, avail // per_row)
        tm_eff = max(8, (tm_eff // 8) * 8)
        # Keep >= 2 M tiles so v7x's two TensorCores both get work.
        half = _round_up((n + 1) // 2, 8)
        tm_eff = min(tm_eff, half, _round_up(n, 8))
    grid_m = -(-n // tm_eff)

    # Tiny, one-time pads/casts of the parameters only (x stays untouched).
    w_p = (
        jnp.zeros((nfeat, n_pad), jnp.bfloat16)
        .at[:, :nclass]
        .set(weight.astype(jnp.bfloat16))
    )
    b_p = (
        jnp.zeros((1, n_pad), jnp.float32)
        .at[0, :nclass]
        .set(bias.astype(jnp.float32))
    )

    flops = 2 * n * nfeat * n_pad
    bytes_accessed = (
        n * nfeat * 4  # x (f32 stream, dominant)
        + nfeat * n_pad * 2  # W (bf16, read once)
        + n_pad * 4  # bias
        + n * n_pad * 4  # out (f32; keep bf16 if downstream allows)
    )

    out_p = pl.pallas_call(
        _mlp_kernel,
        out_shape=jax.ShapeDtypeStruct((n, n_pad), jnp.float32),
        grid=(grid_m,),
        in_specs=[
            # x: streamed M tiles, full K extent.
            pl.BlockSpec((tm_eff, nfeat), lambda i: (i, 0)),
            # W: constant block index -> DMA'd once, VMEM-resident.
            pl.BlockSpec((nfeat, n_pad), lambda i: (0, 0)),
            # bias: constant block index, resident.
            pl.BlockSpec((1, n_pad), lambda i: (0, 0)),
        ],
        out_specs=pl.BlockSpec((tm_eff, n_pad), lambda i: (i, 0)),
        compiler_params=pltpu.CompilerParams(
            dimension_semantics=("parallel",),
            vmem_limit_bytes=int(vmem_limit),
        ),
        cost_estimate=pl.CostEstimate(
            flops=flops, transcendentals=0, bytes_accessed=bytes_accessed
        ),
    )(x, w_p, b_p)

    # Strip the lane padding outside the kernel.
    return out_p[:, :nclass]


def init_params(key, nfeat, nclass):
    """Init matching the PyTorch module (weight shape (nfeat, nclass)).

    kaiming_uniform_(W, mode='fan_out', a=sqrt(5)): fan_out = size(0) = nfeat.
    bias ~ U(-1/sqrt(nclass), 1/sqrt(nclass))  (stdv uses weight.size(1)).
    """
    kw, kb = jax.random.split(key)
    gain = math.sqrt(2.0 / (1.0 + 5.0))
    bound_w = gain * math.sqrt(3.0 / nfeat)
    weight = jax.random.uniform(
        kw, (nfeat, nclass), jnp.float32, minval=-bound_w, maxval=bound_w
    )
    bound_b = 1.0 / math.sqrt(nclass)
    bias = jax.random.uniform(
        kb, (nclass,), jnp.float32, minval=-bound_b, maxval=bound_b
    )
    return weight, bias


def _check(x, weight, bias):
    out = jax.block_until_ready(mlp_classifier_forward(x, weight, bias))
    # Tight check vs. bf16-cast operands with f32 accumulate (the MXU path).
    ref_bf16 = (
        jnp.matmul(
            x.astype(jnp.bfloat16).astype(jnp.float32),
            weight.astype(jnp.bfloat16).astype(jnp.float32),
        )
        + bias
    )
    # Loose check vs. the pure-f32 reference (module semantics).
    ref_f32 = jnp.matmul(x, weight) + bias
    assert out.shape == (x.shape[0], weight.shape[1])
    assert jnp.allclose(out, ref_bf16, atol=2e-3, rtol=2e-3)
    assert jnp.allclose(out, ref_f32, atol=5e-2, rtol=5e-2)


if __name__ == "__main__":
    key = jax.random.PRNGKey(0)
    kx, kp, kx2, kp2 = jax.random.split(key, 4)

    # Module-sized toy shape (single grid step).
    batch, nfeat, nclass = 8, 32, 8
    x = jax.random.normal(kx, (batch, nfeat), jnp.float32)
    weight, bias = init_params(kp, nfeat, nclass)
    _check(x, weight, bias)

    # Larger shape exercising a multi-tile M grid (2 parallel M tiles).
    batch2, nfeat2, nclass2 = 512, 1024, 10
    x2 = jax.random.normal(kx2, (batch2, nfeat2), jnp.float32)
    weight2, bias2 = init_params(kp2, nfeat2, nclass2)
    _check(x2, weight2, bias2)

    print("KERNEL_OK")
</pallas_src>

<mosaic_0001>
module attributes {stable_mosaic.version = 11 : i64} {
  func.func @_mlp_kernel(%arg0: i32, %arg1: memref<8x32xf32, #tpu.memory_space<vmem>>, %arg2: memref<32x128xbf16, #tpu.memory_space<vmem>>, %arg3: memref<1x128xf32, #tpu.memory_space<vmem>>, %arg4: memref<8x128xf32, #tpu.memory_space<vmem>>) attributes {dimension_semantics = [#tpu.dimension_semantics<parallel>], iteration_bounds = array<i64: 1>, scalar_prefetch = 0 : i64, scratch_operands = 0 : i64, tpu.core_type = #tpu.core_type<tc>, window_params = [{transform_indices = @transform_0, window_bounds = array<i64: 8, 32>}, {pipeline_mode = #tpu.pipeline_mode<synchronous>, transform_indices = @transform_1, window_bounds = array<i64: 32, 128>}, {pipeline_mode = #tpu.pipeline_mode<synchronous>, transform_indices = @transform_2, window_bounds = array<i64: 1, 128>}, {transform_indices = @transform_3, window_bounds = array<i64: 8, 128>}]} {
    %c0 = arith.constant 0 : index
    %c0_0 = arith.constant 0 : index
    %0 = vector.load %arg1[%c0, %c0_0] : memref<8x32xf32, #tpu.memory_space<vmem>>, vector<8x32xf32>
    %1 = arith.truncf %0 : vector<8x32xf32> to vector<8x32xbf16>
    %c0_1 = arith.constant 0 : index
    %c0_2 = arith.constant 0 : index
    %2 = vector.load %arg2[%c0_1, %c0_2] : memref<32x128xbf16, #tpu.memory_space<vmem>>, vector<32x128xbf16>
    %cst = arith.constant dense<0.000000e+00> : vector<8x128xf32>
    %3 = tpu.matmul %1, %2, %cst {dimension_numbers = #tpu.dot_dimension_numbers<[1], [0], [0], [1], [0, 0, 1, 1], [], []>} : vector<8x32xbf16>, vector<32x128xbf16>, vector<8x128xf32> -> vector<8x128xf32>
    %c0_3 = arith.constant 0 : index
    %c0_4 = arith.constant 0 : index
    %4 = vector.load %arg3[%c0_3, %c0_4] : memref<1x128xf32, #tpu.memory_space<vmem>>, vector<1x128xf32>
    %5 = vector.broadcast %4 : vector<1x128xf32> to vector<8x128xf32>
    %6 = arith.addf %3, %5 : vector<8x128xf32>
    %c0_5 = arith.constant 0 : index
    %c0_6 = arith.constant 0 : index
    %7 = vector.load %arg4[%c0_5, %c0_6] : memref<8x128xf32, #tpu.memory_space<vmem>>, vector<8x128xf32>
    tpu.vector_store %arg4[%c0_5, %c0_6], %6 {strides = array<i32>} : memref<8x128xf32, #tpu.memory_space<vmem>>, vector<8x128xf32>,
    return
  }
  func.func @transform_0(%arg0: i32) -> (i32, i32) {
    %c0_i32 = arith.constant 0 : i32
    %c0_i32_0 = arith.constant 0 : i32
    return %arg0, %c0_i32 : i32, i32
  }
  func.func @transform_1(%arg0: i32) -> (i32, i32) {
    %c0_i32 = arith.constant 0 : i32
    %c0_i32_0 = arith.constant 0 : i32
    %c0_i32_1 = arith.constant 0 : i32
    return %c0_i32, %c0_i32_0 : i32, i32
  }
  func.func @transform_2(%arg0: i32) -> (i32, i32) {
    %c0_i32 = arith.constant 0 : i32
    %c0_i32_0 = arith.constant 0 : i32
    %c0_i32_1 = arith.constant 0 : i32
    return %c0_i32, %c0_i32_0 : i32, i32
  }
  func.func @transform_3(%arg0: i32) -> (i32, i32) {
    %c0_i32 = arith.constant 0 : i32
    %c0_i32_0 = arith.constant 0 : i32
    return %arg0, %c0_i32 : i32, i32
  }
}

</mosaic_0001>

<llo_original>
// kernel: tpu_custom_call.1
$region0: #{tpu_custom_call.1}
  #allocation0 [shape = 'u32[]', space=smem, size = 0x4, offset = 0x4, fixed_abs, tag = 'smem constant byte address 0x4 - core index']
  #allocation1 [shape = 'u32[144,128]{1,0:T(1,128)}', space=vmem, size = 0x12000, scoped, tag = 'internal scratch']
  %s0 = inlined_call_operand.hbm [shape: f32[8,32], index: 0, kind: input, shape index: {}]
  %s1 = inlined_call_operand.hbm [shape: bf16[32,128], index: 1, kind: input, shape index: {}]
  %s2 = inlined_call_operand.vmem [shape: f32[1,128], index: 2, kind: input, shape index: {}]
  %s3 = inlined_call_operand.hbm [shape: f32[8,128], index: 3, kind: output, shape index: {}]
  %s4 = sld [smem:[#allocation0]]
  $region30: #{tpu_custom_call.1} parent=0
    _
  %s6 = ssub.s32 1, %s4
  %s7 = scalar_select 0, %s6, %s4
  $region1: #{tpu_custom_call.1} parent=0
    #allocation2 [shape = 'u8[4096]{0}', space=vmem, size = 0x1000, scoped, tag = 'input window, operand 0, single buffered']
    #allocation3 [shape = 's32[1]{0}', space=sflag, size = 0x4, scoped, tag = 'scoped memory for tpu_custom_call.1']
    #allocation4 [shape = 's32[1]{0}', space=sflag, size = 0x4, scoped, tag = 'scoped memory for tpu_custom_call.1']
    #allocation5 [shape = 'u8[8192]{0}', space=vmem, size = 0x2000, scoped, tag = 'input window, operand 1, single buffered']
    #allocation6 [shape = 's32[1]{0}', space=sflag, size = 0x4, scoped, tag = 'scoped memory for tpu_custom_call.1']
    #allocation7 [shape = 'u8[4096]{0}', space=vmem, size = 0x1000, scoped, tag = 'output window, operand 0, single buffered']
    %8 = vsyncpa [#allocation3], 0
    %9 = vsyncpa [#allocation6], 0
    %10 = vsyncpa [#allocation4], 0
    // Predicated region
    $region2: #{tpu_custom_call.1} parent=1 // pred_check
      _
    $region3: #{tpu_custom_call.1} parent=1 // pred_check_branch
      %12 = sbr.rel (0) target = $region5
    $region4: #{tpu_custom_call.1} parent=1 // pred_region
      %s14 = ssub.s32 128, 128
      %15 = vsyncadd [#allocation3], %s14
      %s17 = sshll.u32 [#allocation2], 4
      %s18 = int_to_ptr.vmem [resolvable:$true] %s17
      %20 = dma.hbm_to_vmem [thread:$0]  %s0, 128, %s18, [#allocation3]
    $region5: #{tpu_custom_call.1} parent=1 // pred_fallthru
      _
    // Predicated region
    $region6: #{tpu_custom_call.1} parent=1 // pred_check
      _
    $region7: #{tpu_custom_call.1} parent=1 // pred_check_branch
      %22 = sbr.rel (0) target = $region9
    $region8: #{tpu_custom_call.1} parent=1 // pred_region
      %s24 = ssub.s32 256, 256
      %25 = vsyncadd [#allocation6], %s24
      %s26 = sshll.u32 [#allocation5], 4
      %s27 = int_to_ptr.vmem [resolvable:$true] %s26
      %32 = dma.hbm_to_vmem [thread:$0]  %s1, 256, %s27, [#allocation6], 64, 64, 4
    $region9: #{tpu_custom_call.1} parent=1 // pred_fallthru
      _
    // Predicated region
    $region10: #{tpu_custom_call.1} parent=1 // pred_check
      _
    $region11: #{tpu_custom_call.1} parent=1 // pred_check_branch
      %34 = sbr.rel (0) target = $region13
    $region12: #{tpu_custom_call.1} parent=1 // pred_region
      _
    $region13: #{tpu_custom_call.1} parent=1 // pred_fallthru
      _
    // Predicated region
    $region14: #{tpu_custom_call.1} parent=1 // pred_check
      _
    $region15: #{tpu_custom_call.1} parent=1 // pred_check_branch
      %36 = sbr.rel (0) target = $region17
    $region16: #{tpu_custom_call.1} parent=1 // pred_region
      %37 = dma.done [#allocation3], 128
    $region17: #{tpu_custom_call.1} parent=1 // pred_fallthru
      _
    // Predicated region
    $region18: #{tpu_custom_call.1} parent=1 // pred_check
      _
    $region19: #{tpu_custom_call.1} parent=1 // pred_check_branch
      %39 = sbr.rel (0) target = $region21
    $region20: #{tpu_custom_call.1} parent=1 // pred_region
      %40 = dma.done [#allocation6], 256
    $region21: #{tpu_custom_call.1} parent=1 // pred_fallthru
      _
    %v42 = vld [vmem:[#allocation2] sm:$0xff]
    %v43 = vpack.c.bf16 %v42, %v42
    %v44 = vld [vmem:[#allocation5] sm:$0xf]
    %v45 = vld [vmem:[#allocation5 + $0x4] sm:$0xf]
    %v46 = vld [vmem:[#allocation5 + $0x8] sm:$0xf]
    %v47 = vld [vmem:[#allocation5 + $0xc] sm:$0xf]
    %v48 = vld [vmem:[%s2] sm:$0x1]
    %v50 = vlaneseq
    %v51 = vshrl.u32 %v50, 7
    %v52 = vsub.s32 0, %v51
    %v53 = vrot.slane %v48, %v52
    %v59 = vunpack.c.l.b16 %v44
    %v60 = vunpack.c.l.b16 %v45
    %v61 = vunpack.c.l.b16 %v46
    %v62 = vunpack.c.l.b16 %v47
    %v63 = vpack.c.b16 %v60, %v59
    %v64 = vpack.c.b16 %v62, %v61
    %vm67 = vcmask 261120
    %v69 = vsel %vm67, %v43, 0
    %71 = vmatprep.subr.bf16.mxu0 0
    %72 = vmatpush1.bf16.msra.mxu0 %v63
    %73 = vmatprep.subr.bf16.mxu0 0
    %74 = vmatpush1.bf16.msra.mxu0 %v64
    %75 = vmatprep.subr.bf16.mxu0 0
    %76 = vmatpush1.bf16.msra.mxu0 0
    %77 = vmatprep.subr.bf16.mxu0 0
    %78 = vmatpush1.bf16.msra.mxu0 0
    %79 = vmatprep.subr.bf16.mxu0 0
    %80 = vmatpush1.bf16.msra.mxu0 0
    %81 = vmatprep.subr.bf16.mxu0 0
    %82 = vmatpush1.bf16.msra.mxu0 0
    %83 = vmatprep.subr.bf16.mxu0 0
    %84 = vmatpush1.bf16.msra.mxu0 0
    %85 = vmatprep.subr.bf16.mxu0 0
    %86 = vmatpush1.bf16.msra.mxu0 0
    %87 = vmatprep.subr.bf16.mxu0 0
    %88 = vmatpush1.bf16.msra.mxu0 0
    %89 = vmatprep.subr.bf16.mxu0 0
    %90 = vmatpush1.bf16.msra.mxu0 0
    %91 = vmatprep.subr.bf16.mxu0 0
    %92 = vmatpush1.bf16.msra.mxu0 0
    %93 = vmatprep.subr.bf16.mxu0 0
    %94 = vmatpush1.bf16.msra.mxu0 0
    %95 = vmatprep.subr.bf16.mxu0 0
    %96 = vmatpush1.bf16.msra.mxu0 0
    %97 = vmatprep.subr.bf16.mxu0 0
    %98 = vmatpush1.bf16.msra.mxu0 0
    %99 = vmatprep.subr.bf16.mxu0 0
    %100 = vmatpush1.bf16.msra.mxu0 0
    %101 = vmatprep.subr.bf16.mxu0 0
    %102 = vmatpush1.bf16.msra.mxu0 0
    %103 = vmatprep.mubr.bf16.mxu0 0
    %104 = vmatmul.mubr.bf16.gmra.mrb[0].mxu0 %v69
    %v105 = vpop.f32.mrb[0].mxu0
    %v106 = vadd.f32 %v53, %v105
    %v107 = vpop.f32.mrb[0].mxu0
    %v108 = vpop.f32.mrb[0].mxu0
    %v109 = vpop.f32.mrb[0].mxu0
    %110 = vdwg.mxu0
    %111 = vst [vmem:[#allocation7] sm:$0xff] %v106
    // Predicated region
    $region22: #{tpu_custom_call.1} parent=1 // pred_check
      _
    $region23: #{tpu_custom_call.1} parent=1 // pred_check_branch
      %113 = sbr.rel (0) target = $region25
    $region24: #{tpu_custom_call.1} parent=1 // pred_region
      %s115 = ssub.s32 128, 128
      %116 = vsyncadd [#allocation4], %s115
      %s118 = sshll.u32 [#allocation7], 4
      %s119 = int_to_ptr.vmem [resolvable:$true] %s118
      %121 = dma.vmem_to_hbm [thread:$0]  %s119, 128, %s3, [#allocation4]
    $region25: #{tpu_custom_call.1} parent=1 // pred_fallthru
      _
    // Predicated region
    $region26: #{tpu_custom_call.1} parent=1 // pred_check
      _
    $region27: #{tpu_custom_call.1} parent=1 // pred_check_branch
      %123 = sbr.rel (0) target = $region29
    $region28: #{tpu_custom_call.1} parent=1 // pred_region
      %124 = dma.done [#allocation4], 128
    $region29: #{tpu_custom_call.1} parent=1 // pred_fallthru
      _
    %125 = vsyncpa [#allocation3], 1
    %126 = vsyncpa [#allocation6], 1
    %127 = vsyncpa [#allocation4], 1

</llo_original>
